<compile_context>
chip_gen: v7x
topology: tpu7x:2x2x1
jax: 0.10.0
libtpu: 0.0.40
codegen_flags: <defaults>
</compile_context>

<pallas_src>
import jax
import jax.numpy as jnp
from jax import lax
from jax.experimental import pallas as pl
from jax.experimental.pallas import tpu as pltpu

# Synthetic "config" values (the original file references module-level constants).
VOCAB_SIZE = 512
COMPRESSED_VOCAB_SIZE = 128


# ----------------------------------------------------------------------------
# Kernels
# ----------------------------------------------------------------------------
def _linear_kernel_fused(x_ref, w_ref, b_ref, o_ref):
    """Single-K-tile path: o = x @ W.T + b in one shot (no scratch, no pl.when)."""
    acc = lax.dot_general(
        x_ref[...], w_ref[...],
        dimension_numbers=(((1,), (1,)), ((), ())),   # contract K of x with K of W
        preferred_element_type=jnp.float32,
    )
    o_ref[...] = (acc + b_ref[...].astype(jnp.float32)).astype(o_ref.dtype)


def _linear_kernel_acc(x_ref, w_ref, b_ref, o_ref, acc_ref):
    """K-tiled path: accumulate in an f32 VMEM scratch (bf16-safe), write once."""
    k = pl.program_id(2)

    @pl.when(k == 0)
    def _():
        acc_ref[...] = jnp.broadcast_to(
            b_ref[...].astype(jnp.float32), acc_ref.shape)

    acc_ref[...] += lax.dot_general(
        x_ref[...], w_ref[...],
        dimension_numbers=(((1,), (1,)), ((), ())),
        preferred_element_type=jnp.float32,
    )

    @pl.when(k == pl.num_programs(2) - 1)
    def _():
        o_ref[...] = acc_ref[...].astype(o_ref.dtype)


# ----------------------------------------------------------------------------
# Tile-size heuristics
# ----------------------------------------------------------------------------
def _vmem_capacity_bytes():
    try:
        return int(pltpu.get_tpu_info().vmem_capacity_bytes)
    except Exception:
        return 64 * 1024 * 1024   # conservative fallback (v7x per-TC VMEM)


def _largest_m_tile(b, cap=256):
    """Largest divisor of b that is a multiple of 8 and <= cap; else b itself."""
    for d in range(min(cap, b), 7, -1):
        if b % d == 0 and d % 8 == 0:
            return d
    return b


def _pick_tn(n):
    if n >= 256 and n % 256 == 0:
        return 256          # fills the 256-wide MXU on v6e/v7x
    if n % 128 == 0:
        return 128
    return n


def _pick_tk(k, fits):
    """Largest divisor of K that is a multiple of 128 and fits the budget."""
    best_any = None
    for d in range(k, 0, -1):
        if k % d != 0:
            continue
        if d % 128 == 0 and fits(d):
            return d
        if best_any is None and fits(d):
            best_any = d
    return best_any if best_any is not None else k


# ----------------------------------------------------------------------------
# Forward pass
# ----------------------------------------------------------------------------
def encoder_forward(x, weight, bias, *, vmem_budget_bytes=None):
    """Forward pass of Encoder: x @ weight.T + bias.

    x:      (B, K)  f32 or bf16
    weight: (N, K)  PyTorch Linear layout (out_features, in_features), NOT transposed
    bias:   (N,)
    """
    B, K = x.shape
    N, K2 = weight.shape
    assert K2 == K and bias.shape == (N,)

    x_item = jnp.dtype(x.dtype).itemsize
    w_item = jnp.dtype(weight.dtype).itemsize
    out_dtype = x.dtype
    out_item = jnp.dtype(out_dtype).itemsize
    b_item = jnp.dtype(bias.dtype).itemsize

    vmem_cap = _vmem_capacity_bytes()
    if vmem_budget_bytes is None:
        vmem_budget_bytes = int(0.70 * vmem_cap)
    vmem_limit = max(32 * 1024 * 1024,
                     min(int(0.80 * vmem_cap), 100 * 1024 * 1024))

    b2d = bias.reshape(1, N)
    cost = pl.CostEstimate(
        flops=2 * B * N * K,
        transcendentals=0,
        bytes_accessed=(B * K * x_item + N * K * w_item
                        + N * b_item + B * N * out_item),
    )

    tm = _largest_m_tile(B)

    # ---- Path A: keep the whole weight VMEM-resident (one W DMA total) ------
    def _resident_fits(tm_):
        return (2 * N * K * w_item            # W block (counted double-buffered)
                + 2 * tm_ * K * x_item        # x tile, double-buffered
                + 2 * tm_ * N * out_item      # out tile, double-buffered
                + 2 * N * b_item              # bias row
                ) <= vmem_budget_bytes

    tm_res = None
    if _resident_fits(tm):
        tm_res = tm
    else:
        # Prefer shrinking tm over tiling K while the full weight still fits.
        for d in range(tm - 1, 7, -1):
            if B % d == 0 and d % 8 == 0 and _resident_fits(d):
                tm_res = d
                break

    if tm_res is not None:
        tm = tm_res
        return pl.pallas_call(
            _linear_kernel_fused,
            out_shape=jax.ShapeDtypeStruct((B, N), out_dtype),
            grid_spec=pltpu.PrefetchScalarGridSpec(
                num_scalar_prefetch=0,
                grid=(B // tm,),
                in_specs=[
                    pl.BlockSpec((tm, K), lambda i: (i, 0)),   # x tile
                    pl.BlockSpec((N, K), lambda i: (0, 0)),    # W, resident, native layout
                    pl.BlockSpec((1, N), lambda i: (0, 0)),    # bias row
                ],
                out_specs=pl.BlockSpec((tm, N), lambda i: (i, 0)),
            ),
            compiler_params=pltpu.CompilerParams(
                dimension_semantics=("parallel",),
                vmem_limit_bytes=vmem_limit,
            ),
            cost_estimate=cost,
        )(x, weight, b2d)

    # ---- Path B: tile N and K, accumulate into an f32 VMEM scratch ----------
    tn = _pick_tn(N)

    def _tiled_fits(tk_):
        return (2 * tm * tk_ * x_item         # x tile, double-buffered
                + 2 * tn * tk_ * w_item       # W tile, double-buffered
                + 2 * tm * tn * out_item      # out tile, double-buffered
                + tm * tn * 4                 # f32 accumulator scratch
                + 2 * N * b_item              # bias row
                ) <= vmem_budget_bytes

    tk = _pick_tk(K, _tiled_fits)
    assert B % tm == 0 and N % tn == 0 and K % tk == 0

    return pl.pallas_call(
        _linear_kernel_acc,
        out_shape=jax.ShapeDtypeStruct((B, N), out_dtype),
        grid_spec=pltpu.PrefetchScalarGridSpec(
            num_scalar_prefetch=0,
            grid=(B // tm, N // tn, K // tk),
            in_specs=[
                pl.BlockSpec((tm, tk), lambda i, j, k: (i, k)),   # x tile
                pl.BlockSpec((tn, tk), lambda i, j, k: (j, k)),   # W tile (native layout)
                pl.BlockSpec((1, tn), lambda i, j, k: (0, j)),    # bias row
            ],
            out_specs=pl.BlockSpec((tm, tn), lambda i, j, k: (i, j)),
            scratch_shapes=[pltpu.VMEM((tm, tn), jnp.float32)],
        ),
        compiler_params=pltpu.CompilerParams(
            dimension_semantics=("parallel", "parallel", "arbitrary"),
            vmem_limit_bytes=vmem_limit,
        ),
        cost_estimate=cost,
    )(x, weight, b2d)


def encoder_reference(x, weight, bias):
    return (jnp.dot(x.astype(jnp.float32), weight.astype(jnp.float32).T,
                    precision=lax.Precision.HIGHEST)
            + bias.astype(jnp.float32))


if __name__ == "__main__":
    key = jax.random.PRNGKey(0)
    k_x, k_w, k_b, k_x2, k_w2, k_b2 = jax.random.split(key, 6)

    # --- Shipped Encoder shape: (B=8, 512) -> (8, 128), f32 ------------------
    B = 8
    x = jax.random.normal(k_x, (B, VOCAB_SIZE), dtype=jnp.float32)
    bound = 1.0 / (VOCAB_SIZE ** 0.5)
    weight = jax.random.uniform(
        k_w, (COMPRESSED_VOCAB_SIZE, VOCAB_SIZE),
        minval=-bound, maxval=bound, dtype=jnp.float32)
    bias = jax.random.uniform(
        k_b, (COMPRESSED_VOCAB_SIZE,),
        minval=-bound, maxval=bound, dtype=jnp.float32)

    # TODO(synk): save()/load() (torch.save state-dict persistence) has no Pallas
    # equivalent and is intentionally not implemented.
    out = jax.block_until_ready(encoder_forward(x, weight, bias))
    ref = encoder_reference(x, weight, bias)
    assert out.shape == (B, COMPRESSED_VOCAB_SIZE)
    assert jnp.allclose(out, ref, atol=1e-3, rtol=1e-3)

    # --- K-tiled accumulator path (forced small budget), f32 -----------------
    B2, K2, N2 = 16, 1024, 256
    x2 = jax.random.normal(k_x2, (B2, K2), dtype=jnp.float32)
    bound2 = 1.0 / (K2 ** 0.5)
    w2 = jax.random.uniform(k_w2, (N2, K2), minval=-bound2, maxval=bound2,
                            dtype=jnp.float32)
    b2 = jax.random.uniform(k_b2, (N2,), minval=-bound2, maxval=bound2,
                            dtype=jnp.float32)

    out2 = jax.block_until_ready(
        encoder_forward(x2, w2, b2, vmem_budget_bytes=512 * 1024))
    ref2 = encoder_reference(x2, w2, b2)
    assert jnp.allclose(out2, ref2, atol=1e-3, rtol=1e-3)

    # --- bf16 weights/activations, f32 scratch accumulation ------------------
    out3 = jax.block_until_ready(
        encoder_forward(x2.astype(jnp.bfloat16), w2.astype(jnp.bfloat16), b2,
                        vmem_budget_bytes=512 * 1024))
    ref3 = encoder_reference(x2.astype(jnp.bfloat16), w2.astype(jnp.bfloat16), b2)
    assert jnp.allclose(out3.astype(jnp.float32), ref3, atol=5e-2, rtol=5e-2)

    print("KERNEL_OK")
</pallas_src>

<mosaic_0001>
module attributes {stable_mosaic.version = 11 : i64} {
  func.func @_linear_kernel_fused(%arg0: i32, %arg1: memref<8x512xf32, #tpu.memory_space<vmem>>, %arg2: memref<128x512xf32, #tpu.memory_space<vmem>>, %arg3: memref<1x128xf32, #tpu.memory_space<vmem>>, %arg4: memref<8x128xf32, #tpu.memory_space<vmem>>) attributes {dimension_semantics = [#tpu.dimension_semantics<parallel>], iteration_bounds = array<i64: 1>, scalar_prefetch = 0 : i64, scratch_operands = 0 : i64, tpu.core_type = #tpu.core_type<tc>, window_params = [{transform_indices = @transform_0, window_bounds = array<i64: 8, 512>}, {pipeline_mode = #tpu.pipeline_mode<synchronous>, transform_indices = @transform_1, window_bounds = array<i64: 128, 512>}, {pipeline_mode = #tpu.pipeline_mode<synchronous>, transform_indices = @transform_2, window_bounds = array<i64: 1, 128>}, {transform_indices = @transform_3, window_bounds = array<i64: 8, 128>}]} {
    %c0 = arith.constant 0 : index
    %c0_0 = arith.constant 0 : index
    %0 = vector.load %arg1[%c0, %c0_0] : memref<8x512xf32, #tpu.memory_space<vmem>>, vector<8x512xf32>
    %c0_1 = arith.constant 0 : index
    %c0_2 = arith.constant 0 : index
    %1 = vector.load %arg2[%c0_1, %c0_2] : memref<128x512xf32, #tpu.memory_space<vmem>>, vector<128x512xf32>
    %cst = arith.constant dense<0.000000e+00> : vector<8x128xf32>
    %2 = tpu.matmul %0, %1, %cst {dimension_numbers = #tpu.dot_dimension_numbers<[1], [1], [0], [0], [0, 0, 1, 0], [], []>} : vector<8x512xf32>, vector<128x512xf32>, vector<8x128xf32> -> vector<8x128xf32>
    %c0_3 = arith.constant 0 : index
    %c0_4 = arith.constant 0 : index
    %3 = vector.load %arg3[%c0_3, %c0_4] : memref<1x128xf32, #tpu.memory_space<vmem>>, vector<1x128xf32>
    %4 = vector.broadcast %3 : vector<1x128xf32> to vector<8x128xf32>
    %5 = arith.addf %2, %4 : vector<8x128xf32>
    %c0_5 = arith.constant 0 : index
    %c0_6 = arith.constant 0 : index
    %6 = vector.load %arg4[%c0_5, %c0_6] : memref<8x128xf32, #tpu.memory_space<vmem>>, vector<8x128xf32>
    tpu.vector_store %arg4[%c0_5, %c0_6], %5 {strides = array<i32>} : memref<8x128xf32, #tpu.memory_space<vmem>>, vector<8x128xf32>,
    return
  }
  func.func @transform_0(%arg0: i32) -> (i32, i32) {
    %c0_i32 = arith.constant 0 : i32
    %c0_i32_0 = arith.constant 0 : i32
    return %arg0, %c0_i32 : i32, i32
  }
  func.func @transform_1(%arg0: i32) -> (i32, i32) {
    %c0_i32 = arith.constant 0 : i32
    %c0_i32_0 = arith.constant 0 : i32
    %c0_i32_1 = arith.constant 0 : i32
    return %c0_i32, %c0_i32_0 : i32, i32
  }
  func.func @transform_2(%arg0: i32) -> (i32, i32) {
    %c0_i32 = arith.constant 0 : i32
    %c0_i32_0 = arith.constant 0 : i32
    %c0_i32_1 = arith.constant 0 : i32
    return %c0_i32, %c0_i32_0 : i32, i32
  }
  func.func @transform_3(%arg0: i32) -> (i32, i32) {
    %c0_i32 = arith.constant 0 : i32
    %c0_i32_0 = arith.constant 0 : i32
    return %arg0, %c0_i32 : i32, i32
  }
}

</mosaic_0001>

<llo_original>
// kernel: tpu_custom_call.1
$region0: #{tpu_custom_call.1}
  #allocation0 [shape = 'u32[]', space=smem, size = 0x4, offset = 0x4, fixed_abs, tag = 'smem constant byte address 0x4 - core index']
  #allocation1 [shape = 'u32[144,128]{1,0:T(1,128)}', space=vmem, size = 0x12000, scoped, tag = 'internal scratch']
  %s0 = inlined_call_operand.hbm [shape: f32[8,512], index: 0, kind: input, shape index: {}]
  %s1 = inlined_call_operand.hbm [shape: f32[128,512], index: 1, kind: input, shape index: {}]
  %s2 = inlined_call_operand.vmem [shape: f32[1,128], index: 2, kind: input, shape index: {}]
  %s3 = inlined_call_operand.hbm [shape: f32[8,128], index: 3, kind: output, shape index: {}]
  %s4 = sld [smem:[#allocation0]]
  $region30: #{tpu_custom_call.1} parent=0
    _
  %s6 = ssub.s32 1, %s4
  %s7 = scalar_select 0, %s6, %s4
  $region1: #{tpu_custom_call.1} parent=0
    #allocation2 [shape = 'u8[16384]{0}', space=vmem, size = 0x4000, scoped, tag = 'input window, operand 0, single buffered']
    #allocation3 [shape = 's32[1]{0}', space=sflag, size = 0x4, scoped, tag = 'scoped memory for tpu_custom_call.1']
    #allocation4 [shape = 's32[1]{0}', space=sflag, size = 0x4, scoped, tag = 'scoped memory for tpu_custom_call.1']
    #allocation5 [shape = 'u8[262144]{0}', space=vmem, size = 0x40000, scoped, tag = 'input window, operand 1, single buffered']
    #allocation6 [shape = 's32[1]{0}', space=sflag, size = 0x4, scoped, tag = 'scoped memory for tpu_custom_call.1']
    #allocation7 [shape = 'u8[4096]{0}', space=vmem, size = 0x1000, scoped, tag = 'output window, operand 0, single buffered']
    %8 = vsyncpa [#allocation3], 0
    %9 = vsyncpa [#allocation6], 0
    %10 = vsyncpa [#allocation4], 0
    // Predicated region
    $region2: #{tpu_custom_call.1} parent=1 // pred_check
      _
    $region3: #{tpu_custom_call.1} parent=1 // pred_check_branch
      %12 = sbr.rel (0) target = $region5
    $region4: #{tpu_custom_call.1} parent=1 // pred_region
      %s14 = ssub.s32 512, 512
      %15 = vsyncadd [#allocation3], %s14
      %s17 = sshll.u32 [#allocation2], 4
      %s18 = int_to_ptr.vmem [resolvable:$true] %s17
      %20 = dma.hbm_to_vmem [thread:$0]  %s0, 512, %s18, [#allocation3]
    $region5: #{tpu_custom_call.1} parent=1 // pred_fallthru
      _
    // Predicated region
    $region6: #{tpu_custom_call.1} parent=1 // pred_check
      _
    $region7: #{tpu_custom_call.1} parent=1 // pred_check_branch
      %22 = sbr.rel (0) target = $region9
    $region8: #{tpu_custom_call.1} parent=1 // pred_region
      %s24 = ssub.s32 8192, 8192
      %25 = vsyncadd [#allocation6], %s24
      %s26 = sshll.u32 [#allocation5], 4
      %s27 = int_to_ptr.vmem [resolvable:$true] %s26
      %32 = dma.hbm_to_vmem [thread:$0]  %s1, 8192, %s27, [#allocation6], 512, 512, 32
    $region9: #{tpu_custom_call.1} parent=1 // pred_fallthru
      _
    // Predicated region
    $region10: #{tpu_custom_call.1} parent=1 // pred_check
      _
    $region11: #{tpu_custom_call.1} parent=1 // pred_check_branch
      %34 = sbr.rel (0) target = $region13
    $region12: #{tpu_custom_call.1} parent=1 // pred_region
      _
    $region13: #{tpu_custom_call.1} parent=1 // pred_fallthru
      _
    // Predicated region
    $region14: #{tpu_custom_call.1} parent=1 // pred_check
      _
    $region15: #{tpu_custom_call.1} parent=1 // pred_check_branch
      %36 = sbr.rel (0) target = $region17
    $region16: #{tpu_custom_call.1} parent=1 // pred_region
      %37 = dma.done [#allocation3], 512
    $region17: #{tpu_custom_call.1} parent=1 // pred_fallthru
      _
    // Predicated region
    $region18: #{tpu_custom_call.1} parent=1 // pred_check
      _
    $region19: #{tpu_custom_call.1} parent=1 // pred_check_branch
      %39 = sbr.rel (0) target = $region21
    $region20: #{tpu_custom_call.1} parent=1 // pred_region
      %40 = dma.done [#allocation6], 8192
    $region21: #{tpu_custom_call.1} parent=1 // pred_fallthru
      _
    %v41 = vld [vmem:[#allocation2] sm:$0xff]
    %v42 = vld [vmem:[#allocation2 + $0x8] sm:$0xff]
    %v43 = vld [vmem:[#allocation2 + $0x10] sm:$0xff]
    %v44 = vld [vmem:[#allocation2 + $0x18] sm:$0xff]
    %v45 = vld [vmem:[#allocation5] sm:$0xff]
    %v46 = vld [vmem:[#allocation5 + $0x8] sm:$0xff]
    %v47 = vld [vmem:[#allocation5 + $0x10] sm:$0xff]
    %v48 = vld [vmem:[#allocation5 + $0x18] sm:$0xff]
    %v49 = vld [vmem:[#allocation5 + $0x20] sm:$0xff]
    %v50 = vld [vmem:[#allocation5 + $0x28] sm:$0xff]
    %v51 = vld [vmem:[#allocation5 + $0x30] sm:$0xff]
    %v52 = vld [vmem:[#allocation5 + $0x38] sm:$0xff]
    %v53 = vld [vmem:[#allocation5 + $0x40] sm:$0xff]
    %v54 = vld [vmem:[#allocation5 + $0x48] sm:$0xff]
    %v55 = vld [vmem:[#allocation5 + $0x50] sm:$0xff]
    %v56 = vld [vmem:[#allocation5 + $0x58] sm:$0xff]
    %v57 = vld [vmem:[#allocation5 + $0x60] sm:$0xff]
    %v58 = vld [vmem:[#allocation5 + $0x68] sm:$0xff]
    %v59 = vld [vmem:[#allocation5 + $0x70] sm:$0xff]
    %v60 = vld [vmem:[#allocation5 + $0x78] sm:$0xff]
    %v61 = vld [vmem:[#allocation5 + $0x80] sm:$0xff]
    %v62 = vld [vmem:[#allocation5 + $0x88] sm:$0xff]
    %v63 = vld [vmem:[#allocation5 + $0x90] sm:$0xff]
    %v64 = vld [vmem:[#allocation5 + $0x98] sm:$0xff]
    %v65 = vld [vmem:[#allocation5 + $0xa0] sm:$0xff]
    %v66 = vld [vmem:[#allocation5 + $0xa8] sm:$0xff]
    %v67 = vld [vmem:[#allocation5 + $0xb0] sm:$0xff]
    %v68 = vld [vmem:[#allocation5 + $0xb8] sm:$0xff]
    %v69 = vld [vmem:[#allocation5 + $0xc0] sm:$0xff]
    %v70 = vld [vmem:[#allocation5 + $0xc8] sm:$0xff]
    %v71 = vld [vmem:[#allocation5 + $0xd0] sm:$0xff]
    %v72 = vld [vmem:[#allocation5 + $0xd8] sm:$0xff]
    %v73 = vld [vmem:[#allocation5 + $0xe0] sm:$0xff]
    %v74 = vld [vmem:[#allocation5 + $0xe8] sm:$0xff]
    %v75 = vld [vmem:[#allocation5 + $0xf0] sm:$0xff]
    %v76 = vld [vmem:[#allocation5 + $0xf8] sm:$0xff]
    %v77 = vld [vmem:[#allocation5 + $0x100] sm:$0xff]
    %v78 = vld [vmem:[#allocation5 + $0x108] sm:$0xff]
    %v79 = vld [vmem:[#allocation5 + $0x110] sm:$0xff]
    %v80 = vld [vmem:[#allocation5 + $0x118] sm:$0xff]
    %v81 = vld [vmem:[#allocation5 + $0x120] sm:$0xff]
    %v82 = vld [vmem:[#allocation5 + $0x128] sm:$0xff]
    %v83 = vld [vmem:[#allocation5 + $0x130] sm:$0xff]
    %v84 = vld [vmem:[#allocation5 + $0x138] sm:$0xff]
    %v85 = vld [vmem:[#allocation5 + $0x140] sm:$0xff]
    %v86 = vld [vmem:[#allocation5 + $0x148] sm:$0xff]
    %v87 = vld [vmem:[#allocation5 + $0x150] sm:$0xff]
    %v88 = vld [vmem:[#allocation5 + $0x158] sm:$0xff]
    %v89 = vld [vmem:[#allocation5 + $0x160] sm:$0xff]
    %v90 = vld [vmem:[#allocation5 + $0x168] sm:$0xff]
    %v91 = vld [vmem:[#allocation5 + $0x170] sm:$0xff]
    %v92 = vld [vmem:[#allocation5 + $0x178] sm:$0xff]
    %v93 = vld [vmem:[#allocation5 + $0x180] sm:$0xff]
    %v94 = vld [vmem:[#allocation5 + $0x188] sm:$0xff]
    %v95 = vld [vmem:[#allocation5 + $0x190] sm:$0xff]
    %v96 = vld [vmem:[#allocation5 + $0x198] sm:$0xff]
    %v97 = vld [vmem:[#allocation5 + $0x1a0] sm:$0xff]
    %v98 = vld [vmem:[#allocation5 + $0x1a8] sm:$0xff]
    %v99 = vld [vmem:[#allocation5 + $0x1b0] sm:$0xff]
    %v100 = vld [vmem:[#allocation5 + $0x1b8] sm:$0xff]
    %v101 = vld [vmem:[#allocation5 + $0x1c0] sm:$0xff]
    %v102 = vld [vmem:[#allocation5 + $0x1c8] sm:$0xff]
    %v103 = vld [vmem:[#allocation5 + $0x1d0] sm:$0xff]
    %v104 = vld [vmem:[#allocation5 + $0x1d8] sm:$0xff]
    %v105 = vld [vmem:[#allocation5 + $0x1e0] sm:$0xff]
    %v106 = vld [vmem:[#allocation5 + $0x1e8] sm:$0xff]
    %v107 = vld [vmem:[#allocation5 + $0x1f0] sm:$0xff]
    %v108 = vld [vmem:[#allocation5 + $0x1f8] sm:$0xff]
    %v109 = vld [vmem:[%s2] sm:$0x1]
    %v111 = vlaneseq
    %v112 = vshrl.u32 %v111, 7
    %v113 = vsub.s32 0, %v112
    %v114 = vrot.slane %v109, %v113
    %116 = vmatprep.subr.mxu0 %v46
    %117 = vmatpush1.xpose.msra.mxu0 %v45
    %118 = vmatprep.subr.mxu0 %v50
    %119 = vmatpush1.xpose.msra.mxu0 %v49
    %120 = vmatprep.subr.mxu0 %v54
    %121 = vmatpush1.xpose.msra.mxu0 %v53
    %122 = vmatprep.subr.mxu0 %v58
    %123 = vmatpush1.xpose.msra.mxu0 %v57
    %124 = vmatprep.subr.mxu0 %v62
    %125 = vmatpush1.xpose.msra.mxu0 %v61
    %126 = vmatprep.subr.mxu0 %v66
    %127 = vmatpush1.xpose.msra.mxu0 %v65
    %128 = vmatprep.subr.mxu0 %v70
    %129 = vmatpush1.xpose.msra.mxu0 %v69
    %130 = vmatprep.subr.mxu0 %v74
    %131 = vmatpush1.xpose.msra.mxu0 %v73
    %132 = vmatprep.subr.mxu0 %v78
    %133 = vmatpush1.xpose.msra.mxu0 %v77
    %134 = vmatprep.subr.mxu0 %v82
    %135 = vmatpush1.xpose.msra.mxu0 %v81
    %136 = vmatprep.subr.mxu0 %v86
    %137 = vmatpush1.xpose.msra.mxu0 %v85
    %138 = vmatprep.subr.mxu0 %v90
    %139 = vmatpush1.xpose.msra.mxu0 %v89
    %140 = vmatprep.subr.mxu0 %v94
    %141 = vmatpush1.xpose.msra.mxu0 %v93
    %142 = vmatprep.subr.mxu0 %v98
    %143 = vmatpush1.xpose.msra.mxu0 %v97
    %144 = vmatprep.subr.mxu0 %v102
    %145 = vmatpush1.xpose.msra.mxu0 %v101
    %146 = vmatprep.subr.mxu0 %v106
    %147 = vmatpush1.xpose.msra.mxu0 %v105
    %148 = vmatprep.subr.mxu0 0.0
    %149 = vmatpush1.xpose.msra.mxu0 0.0
    %150 = vmatprep.subr.mxu0 0.0
    %151 = vmatpush1.xpose.msra.mxu0 0.0
    %152 = vmatprep.subr.mxu0 0.0
    %153 = vmatpush1.xpose.msra.mxu0 0.0
    %154 = vmatprep.subr.mxu0 0.0
    %155 = vmatpush1.xpose.msra.mxu0 0.0
    %156 = vmatprep.subr.mxu0 0.0
    %157 = vmatpush1.xpose.msra.mxu0 0.0
    %158 = vmatprep.subr.mxu0 0.0
    %159 = vmatpush1.xpose.msra.mxu0 0.0
    %160 = vmatprep.subr.mxu0 0.0
    %161 = vmatpush1.xpose.msra.mxu0 0.0
    %162 = vmatprep.subr.mxu0 0.0
    %163 = vmatpush1.xpose.msra.mxu0 0.0
    %164 = vmatprep.subr.mxu0 0.0
    %165 = vmatpush1.xpose.msra.mxu0 0.0
    %166 = vmatprep.subr.mxu0 0.0
    %167 = vmatpush1.xpose.msra.mxu0 0.0
    %168 = vmatprep.subr.mxu0 0.0
    %169 = vmatpush1.xpose.msra.mxu0 0.0
    %170 = vmatprep.subr.mxu0 0.0
    %171 = vmatpush1.xpose.msra.mxu0 0.0
    %172 = vmatprep.subr.mxu0 0.0
    %173 = vmatpush1.xpose.msra.mxu0 0.0
    %174 = vmatprep.subr.mxu0 0.0
    %175 = vmatpush1.xpose.msra.mxu0 0.0
    %176 = vmatprep.subr.mxu0 0.0
    %177 = vmatpush1.xpose.msra.mxu0 0.0
    %178 = vmatprep.subr.mxu0 0.0
    %179 = vmatpush1.xpose.msra.mxu0 0.0
    %180 = vmatprep.mubr.f32.mxu0 %v42
    %181 = vmatmul.mubr.f32.gmra.mrb[0].mxu0 %v41
    %v182 = vpop.f32.mrb[0].mxu0
    %v183 = vadd.f32 %v114, %v182
    %v184 = vpop.f32.mrb[0].mxu0
    %185 = vdwg.mxu0
    %186 = vmatprep.subr.mxu0 %v48
    %187 = vmatpush1.xpose.msra.mxu0 %v47
    %188 = vmatprep.subr.mxu0 %v52
    %189 = vmatpush1.xpose.msra.mxu0 %v51
    %190 = vmatprep.subr.mxu0 %v56
    %191 = vmatpush1.xpose.msra.mxu0 %v55
    %192 = vmatprep.subr.mxu0 %v60
    %193 = vmatpush1.xpose.msra.mxu0 %v59
    %194 = vmatprep.subr.mxu0 %v64
    %195 = vmatpush1.xpose.msra.mxu0 %v63
    %196 = vmatprep.subr.mxu0 %v68
    %197 = vmatpush1.xpose.msra.mxu0 %v67
    %198 = vmatprep.subr.mxu0 %v72
    %199 = vmatpush1.xpose.msra.mxu0 %v71
    %200 = vmatprep.subr.mxu0 %v76
    %201 = vmatpush1.xpose.msra.mxu0 %v75
    %202 = vmatprep.subr.mxu0 %v80
    %203 = vmatpush1.xpose.msra.mxu0 %v79
    %204 = vmatprep.subr.mxu0 %v84
    %205 = vmatpush1.xpose.msra.mxu0 %v83
    %206 = vmatprep.subr.mxu0 %v88
    %207 = vmatpush1.xpose.msra.mxu0 %v87
    %208 = vmatprep.subr.mxu0 %v92
    %209 = vmatpush1.xpose.msra.mxu0 %v91
    %210 = vmatprep.subr.mxu0 %v96
    %211 = vmatpush1.xpose.msra.mxu0 %v95
    %212 = vmatprep.subr.mxu0 %v100
    %213 = vmatpush1.xpose.msra.mxu0 %v99
    %214 = vmatprep.subr.mxu0 %v104
    %215 = vmatpush1.xpose.msra.mxu0 %v103
    %216 = vmatprep.subr.mxu0 %v108
    %217 = vmatpush1.xpose.msra.mxu0 %v107
    %218 = vmatprep.subr.mxu0 0.0
    %219 = vmatpush1.xpose.msra.mxu0 0.0
    %220 = vmatprep.subr.mxu0 0.0
    %221 = vmatpush1.xpose.msra.mxu0 0.0
    %222 = vmatprep.subr.mxu0 0.0
    %223 = vmatpush1.xpose.msra.mxu0 0.0
    %224 = vmatprep.subr.mxu0 0.0
    %225 = vmatpush1.xpose.msra.mxu0 0.0
    %226 = vmatprep.subr.mxu0 0.0
    %227 = vmatpush1.xpose.msra.mxu0 0.0
    %228 = vmatprep.subr.mxu0 0.0
    %229 = vmatpush1.xpose.msra.mxu0 0.0
    %230 = vmatprep.subr.mxu0 0.0
    %231 = vmatpush1.xpose.msra.mxu0 0.0
    %232 = vmatprep.subr.mxu0 0.0
    %233 = vmatpush1.xpose.msra.mxu0 0.0
    %234 = vmatprep.subr.mxu0 0.0
    %235 = vmatpush1.xpose.msra.mxu0 0.0
    %236 = vmatprep.subr.mxu0 0.0
    %237 = vmatpush1.xpose.msra.mxu0 0.0
    %238 = vmatprep.subr.mxu0 0.0
    %239 = vmatpush1.xpose.msra.mxu0 0.0
    %240 = vmatprep.subr.mxu0 0.0
    %241 = vmatpush1.xpose.msra.mxu0 0.0
    %242 = vmatprep.subr.mxu0 0.0
    %243 = vmatpush1.xpose.msra.mxu0 0.0
    %244 = vmatprep.subr.mxu0 0.0
    %245 = vmatpush1.xpose.msra.mxu0 0.0
    %246 = vmatprep.subr.mxu0 0.0
    %247 = vmatpush1.xpose.msra.mxu0 0.0
    %248 = vmatprep.subr.mxu0 0.0
    %249 = vmatpush1.xpose.msra.mxu0 0.0
    %250 = vmatprep.mubr.f32.mxu0 %v44
    %251 = vmatmul.mubr.f32.gmra.mrb[0].mxu0 %v43
    %v252 = vpop.f32.mrb[0].mxu0
    %v253 = vadd.f32 %v183, %v252
    %v254 = vpop.f32.mrb[0].mxu0
    %255 = vdwg.mxu0
    %256 = vst [vmem:[#allocation7] sm:$0xff] %v253
    // Predicated region
    $region22: #{tpu_custom_call.1} parent=1 // pred_check
      _
    $region23: #{tpu_custom_call.1} parent=1 // pred_check_branch
      %258 = sbr.rel (0) target = $region25
    $region24: #{tpu_custom_call.1} parent=1 // pred_region
      %s260 = ssub.s32 128, 128
      %261 = vsyncadd [#allocation4], %s260
      %s263 = sshll.u32 [#allocation7], 4
      %s264 = int_to_ptr.vmem [resolvable:$true] %s263
      %266 = dma.vmem_to_hbm [thread:$0]  %s264, 128, %s3, [#allocation4]
    $region25: #{tpu_custom_call.1} parent=1 // pred_fallthru
      _
    // Predicated region
    $region26: #{tpu_custom_call.1} parent=1 // pred_check
      _
    $region27: #{tpu_custom_call.1} parent=1 // pred_check_branch
      %268 = sbr.rel (0) target = $region29
    $region28: #{tpu_custom_call.1} parent=1 // pred_region
      %269 = dma.done [#allocation4], 128
    $region29: #{tpu_custom_call.1} parent=1 // pred_fallthru
      _
    %270 = vsyncpa [#allocation3], 1
    %271 = vsyncpa [#allocation6], 1
    %272 = vsyncpa [#allocation4], 1

</llo_original>
